<compile_context>
chip_gen: v5e
topology: v5e:2x2
jax: 0.10.0
libtpu: 0.0.40
codegen_flags: <defaults>
</compile_context>

<pallas_src>
import math

import jax
import jax.numpy as jnp
from jax.experimental import pallas as pl
from jax.experimental.pallas import tpu as pltpu


def _round_up(x, m):
    return ((x + m - 1) // m) * m


def edgelized_linear_kernel(x_ref, w_ref, b_ref, o_ref):
    # x_ref: (tm, K)   w_ref: (K, tn)   b_ref: (1, tn) f32   o_ref: (tm, tn)
    acc = jnp.dot(x_ref[...], w_ref[...], preferred_element_type=jnp.float32)
    acc = acc + b_ref[...]                      # f32 epilogue, broadcast over rows
    o_ref[...] = acc.astype(o_ref.dtype)


def edgelized_linear(x, weight, bias, *, tm=256, tn=512,
                     compute_dtype=None, out_dtype=None,
                     vmem_budget_bytes=40 * 1024 * 1024):
    """y = x @ weight + bias.

    x: [..., K]; weight: [K, N]; bias: [1, N] or [N].  Returns [..., N].
    compute_dtype=jnp.bfloat16 runs the MXU in bf16 with f32 accumulation.
    """
    *lead, K = x.shape
    Kw, N = weight.shape
    assert K == Kw, "in_features mismatch"
    M = int(math.prod(lead)) if lead else 1
    out_dtype = out_dtype if out_dtype is not None else x.dtype

    x2d = x.reshape(M, K)
    w2d = weight
    if compute_dtype is not None:
        x2d = x2d.astype(compute_dtype)
        w2d = w2d.astype(compute_dtype)
    b2d = jnp.asarray(bias).reshape(1, N).astype(jnp.float32)

    x_bpe = x2d.dtype.itemsize
    w_bpe = w2d.dtype.itemsize
    o_bpe = jnp.dtype(out_dtype).itemsize

    # MXU-aligned tile sizes, capped to the (padded) problem size.
    tm = max(8, min(_round_up(tm, 8), _round_up(M, 8)))
    tn = max(128, min(_round_up(tn, 128), _round_up(N, 128)))

    def working_set(tm_, tn_):
        # double-buffered x / W / bias / out tiles
        return 2 * (tm_ * K * x_bpe + K * tn_ * w_bpe + tn_ * 4 + tm_ * tn_ * o_bpe)

    # Shrink tiles (tn first, then tm) until the double-buffered working set fits
    # the budget (sized for v7x's 64 MiB physical VMEM per TensorCore).
    while working_set(tm, tn) > vmem_budget_bytes and tn > 128:
        tn = max(128, tn // 2)
    while working_set(tm, tn) > vmem_budget_bytes and tm > 8:
        tm = max(8, tm // 2)

    M_pad = _round_up(M, tm)
    N_pad = _round_up(N, tn)
    if M_pad != M:
        x2d = jnp.pad(x2d, ((0, M_pad - M), (0, 0)))
    if N_pad != N:
        w2d = jnp.pad(w2d, ((0, 0), (0, N_pad - N)))
        b2d = jnp.pad(b2d, ((0, 0), (0, N_pad - N)))

    # Outer axis: N tiles, inner axis: M tiles.  W / bias block indices depend only
    # on the outer axis, so Pallas holds them in VMEM across the whole inner sweep.
    grid = (N_pad // tn, M_pad // tm)

    vmem_limit = int(min(max(working_set(tm, tn) + (2 << 20), 8 << 20), 64 << 20))

    cost = pl.CostEstimate(
        flops=2 * M_pad * K * N_pad,
        transcendentals=0,
        bytes_accessed=(M_pad * K * x_bpe) * (N_pad // tn)   # x streamed per N tile
        + K * N_pad * w_bpe                                  # W fetched once
        + M_pad * N_pad * o_bpe,
    )

    out2d = pl.pallas_call(
        edgelized_linear_kernel,
        out_shape=jax.ShapeDtypeStruct((M_pad, N_pad), out_dtype),
        grid_spec=pltpu.PrefetchScalarGridSpec(
            num_scalar_prefetch=0,
            grid=grid,
            in_specs=[
                pl.BlockSpec((tm, K), lambda j, i: (i, 0)),   # x tile: full K
                pl.BlockSpec((K, tn), lambda j, i: (0, j)),   # W tile: held over inner axis
                pl.BlockSpec((1, tn), lambda j, i: (0, j)),   # bias tile
            ],
            out_specs=pl.BlockSpec((tm, tn), lambda j, i: (i, j)),
        ),
        compiler_params=pltpu.CompilerParams(
            dimension_semantics=("parallel", "parallel"),
            vmem_limit_bytes=vmem_limit,
        ),
        cost_estimate=cost,
    )(x2d, w2d, b2d)

    out2d = out2d[:M, :N]
    return out2d.reshape(*lead, N)


if __name__ == "__main__":
    # EdgelizedLinear(in_features=32, out_features=128) applied to [batch=2, seq=8, 32]
    B, S, K, N = 2, 8, 32, 128

    key = jax.random.PRNGKey(0)
    kx, kw, kb = jax.random.split(key, 3)

    x = jax.random.normal(kx, (B, S, K), dtype=jnp.float32)
    weight = jax.random.normal(kw, (K, N), dtype=jnp.float32) * (1.0 / K ** 0.5)
    bias = jax.random.normal(kb, (1, N), dtype=jnp.float32) * 0.1

    ref = x @ weight + bias

    # f32 path (bit-for-bit semantics of the PyTorch module)
    y_f32 = edgelized_linear(x, weight, bias)
    jax.block_until_ready(y_f32)
    assert y_f32.shape == (B, S, N)
    assert jnp.allclose(y_f32, ref, atol=1e-5, rtol=1e-5), "f32 mismatch vs reference"

    # bf16-operand / f32-accumulation fast path (MXU peak); looser tolerance expected
    y_bf16 = edgelized_linear(x, weight, bias,
                              compute_dtype=jnp.bfloat16, out_dtype=jnp.float32)
    jax.block_until_ready(y_bf16)
    assert jnp.allclose(y_bf16, ref, atol=5e-2, rtol=5e-2), "bf16 mismatch vs reference"

    print("KERNEL_OK")
</pallas_src>

<mosaic_0001>
module attributes {stable_mosaic.version = 11 : i64} {
  func.func @edgelized_linear_kernel(%arg0: i32, %arg1: i32, %arg2: memref<16x32xf32, #tpu.memory_space<vmem>>, %arg3: memref<32x128xf32, #tpu.memory_space<vmem>>, %arg4: memref<1x128xf32, #tpu.memory_space<vmem>>, %arg5: memref<16x128xf32, #tpu.memory_space<vmem>>) attributes {dimension_semantics = [#tpu.dimension_semantics<parallel>, #tpu.dimension_semantics<parallel>], iteration_bounds = array<i64: 1, 1>, scalar_prefetch = 0 : i64, scratch_operands = 0 : i64, tpu.core_type = #tpu.core_type<tc>, window_params = [{transform_indices = @transform_0, window_bounds = array<i64: 16, 32>}, {transform_indices = @transform_1, window_bounds = array<i64: 32, 128>}, {transform_indices = @transform_2, window_bounds = array<i64: 1, 128>}, {transform_indices = @transform_3, window_bounds = array<i64: 16, 128>}]} {
    %c0 = arith.constant 0 : index
    %c0_0 = arith.constant 0 : index
    %0 = vector.load %arg2[%c0, %c0_0] : memref<16x32xf32, #tpu.memory_space<vmem>>, vector<16x32xf32>
    %c0_1 = arith.constant 0 : index
    %c0_2 = arith.constant 0 : index
    %1 = vector.load %arg3[%c0_1, %c0_2] : memref<32x128xf32, #tpu.memory_space<vmem>>, vector<32x128xf32>
    %cst = arith.constant dense<0.000000e+00> : vector<16x128xf32>
    %2 = tpu.matmul %0, %1, %cst {dimension_numbers = #tpu.dot_dimension_numbers<[1], [0], [0], [1], [0, 0, 1, 1], [], []>} : vector<16x32xf32>, vector<32x128xf32>, vector<16x128xf32> -> vector<16x128xf32>
    %c0_3 = arith.constant 0 : index
    %c0_4 = arith.constant 0 : index
    %3 = vector.load %arg4[%c0_3, %c0_4] : memref<1x128xf32, #tpu.memory_space<vmem>>, vector<1x128xf32>
    %4 = vector.broadcast %3 : vector<1x128xf32> to vector<16x128xf32>
    %5 = arith.addf %2, %4 : vector<16x128xf32>
    %c0_5 = arith.constant 0 : index
    %c0_6 = arith.constant 0 : index
    %6 = vector.load %arg5[%c0_5, %c0_6] : memref<16x128xf32, #tpu.memory_space<vmem>>, vector<16x128xf32>
    tpu.vector_store %arg5[%c0_5, %c0_6], %5 {strides = array<i32>} : memref<16x128xf32, #tpu.memory_space<vmem>>, vector<16x128xf32>,
    return
  }
  func.func @transform_0(%arg0: i32, %arg1: i32) -> (i32, i32) {
    %c0_i32 = arith.constant 0 : i32
    %c0_i32_0 = arith.constant 0 : i32
    return %arg1, %c0_i32 : i32, i32
  }
  func.func @transform_1(%arg0: i32, %arg1: i32) -> (i32, i32) {
    %c0_i32 = arith.constant 0 : i32
    %c0_i32_0 = arith.constant 0 : i32
    return %c0_i32, %arg0 : i32, i32
  }
  func.func @transform_2(%arg0: i32, %arg1: i32) -> (i32, i32) {
    %c0_i32 = arith.constant 0 : i32
    %c0_i32_0 = arith.constant 0 : i32
    return %c0_i32, %arg0 : i32, i32
  }
  func.func @transform_3(%arg0: i32, %arg1: i32) -> (i32, i32) {
    %c0_i32 = arith.constant 0 : i32
    return %arg1, %arg0 : i32, i32
  }
}

</mosaic_0001>

<llo_original>
// kernel: tpu_custom_call.1
$region0: #{tpu_custom_call.1}
  #allocation0 [shape = 'u32[]', space=smem, size = 0x4, offset = 0x4, fixed_abs, tag = 'smem constant byte address 0x4 - core index']
  #allocation1 [shape = 'u32[72,128]{1,0:T(1,128)}', space=vmem, size = 0x9000, scoped, tag = 'internal scratch']
  %s0 = inlined_call_operand.hbm [shape: f32[16,32], index: 0, kind: input, shape index: {}]
  %s1 = inlined_call_operand.hbm [shape: f32[32,128], index: 1, kind: input, shape index: {}]
  %s2 = inlined_call_operand.vmem [shape: f32[1,128], index: 2, kind: input, shape index: {}]
  %s3 = inlined_call_operand.hbm [shape: f32[16,128], index: 3, kind: output, shape index: {}]
  %s4 = sld [smem:[#allocation0]]
  $region30: #{tpu_custom_call.1} parent=0
    _
  %s6 = ssub.s32 1, %s4
  %s7 = scalar_select 0, %s6, %s4
  $region1: #{tpu_custom_call.1} parent=0
    #allocation2 [shape = 'u8[8192]{0}', space=vmem, size = 0x2000, scoped, tag = 'input window, operand 0, single buffered']
    #allocation3 [shape = 's32[1]{0}', space=sflag, size = 0x4, scoped, tag = 'scoped memory for tpu_custom_call.1']
    #allocation4 [shape = 's32[1]{0}', space=sflag, size = 0x4, scoped, tag = 'scoped memory for tpu_custom_call.1']
    #allocation5 [shape = 'u8[16384]{0}', space=vmem, size = 0x4000, scoped, tag = 'input window, operand 1, single buffered']
    #allocation6 [shape = 's32[1]{0}', space=sflag, size = 0x4, scoped, tag = 'scoped memory for tpu_custom_call.1']
    #allocation7 [shape = 'u8[8192]{0}', space=vmem, size = 0x2000, scoped, tag = 'output window, operand 0, single buffered']
    %8 = vsyncpa [#allocation3], 0
    %9 = vsyncpa [#allocation6], 0
    %10 = vsyncpa [#allocation4], 0
    // Predicated region
    $region2: #{tpu_custom_call.1} parent=1 // pred_check
      _
    $region3: #{tpu_custom_call.1} parent=1 // pred_check_branch
      %12 = sbr.rel (0) target = $region5
    $region4: #{tpu_custom_call.1} parent=1 // pred_region
      %14 = vsyncadd [#allocation3], 0
      %s15 = sshll.u32 %s0, 4
      %s16 = int_to_ptr.hbm [resolvable:$true] %s15
      %s17 = sshll.u32 [#allocation2], 4
      %s18 = int_to_ptr.vmem [resolvable:$true] %s17
      %23 = dma.hbm_to_vmem [thread:$0]  %s16, 256, %s18, [#allocation3], 128, 128, 8
    $region5: #{tpu_custom_call.1} parent=1 // pred_fallthru
      _
    // Predicated region
    $region6: #{tpu_custom_call.1} parent=1 // pred_check
      _
    $region7: #{tpu_custom_call.1} parent=1 // pred_check_branch
      %25 = sbr.rel (0) target = $region9
    $region8: #{tpu_custom_call.1} parent=1 // pred_region
      %27 = vsyncadd [#allocation6], 0
      %s28 = sshll.u32 %s1, 4
      %s29 = int_to_ptr.hbm [resolvable:$true] %s28
      %s30 = sshll.u32 [#allocation5], 4
      %s31 = int_to_ptr.vmem [resolvable:$true] %s30
      %36 = dma.hbm_to_vmem [thread:$0]  %s29, 512, %s31, [#allocation6], 128, 128, 8
    $region9: #{tpu_custom_call.1} parent=1 // pred_fallthru
      _
    // Predicated region
    $region10: #{tpu_custom_call.1} parent=1 // pred_check
      _
    $region11: #{tpu_custom_call.1} parent=1 // pred_check_branch
      %38 = sbr.rel (0) target = $region13
    $region12: #{tpu_custom_call.1} parent=1 // pred_region
      _
    $region13: #{tpu_custom_call.1} parent=1 // pred_fallthru
      _
    // Predicated region
    $region14: #{tpu_custom_call.1} parent=1 // pred_check
      _
    $region15: #{tpu_custom_call.1} parent=1 // pred_check_branch
      %40 = sbr.rel (0) target = $region17
    $region16: #{tpu_custom_call.1} parent=1 // pred_region
      %42 = dma.done [#allocation3], 256
    $region17: #{tpu_custom_call.1} parent=1 // pred_fallthru
      _
    // Predicated region
    $region18: #{tpu_custom_call.1} parent=1 // pred_check
      _
    $region19: #{tpu_custom_call.1} parent=1 // pred_check_branch
      %44 = sbr.rel (0) target = $region21
    $region20: #{tpu_custom_call.1} parent=1 // pred_region
      %46 = dma.done [#allocation6], 512
    $region21: #{tpu_custom_call.1} parent=1 // pred_fallthru
      _
    %v47 = vld [vmem:[#allocation2] sm:$0xff]
    %v48 = vld [vmem:[#allocation2 + $0x8] sm:$0xff]
    %v49 = vld [vmem:[#allocation5] sm:$0xff]
    %v50 = vld [vmem:[#allocation5 + $0x8] sm:$0xff]
    %v51 = vld [vmem:[#allocation5 + $0x10] sm:$0xff]
    %v52 = vld [vmem:[#allocation5 + $0x18] sm:$0xff]
    %v53 = vld [vmem:[%s2] sm:$0x1]
    %v55 = vperm.slane %v53, 0
    %vm57 = vcmask 261120
    %v59 = vsel %vm57, %v47, 0
    %v62 = vsel %vm57, %v48, 0
    %64 = vmatpush.msra.mxu0 0.0
    %65 = vmatpush.msra.mxu0 0.0
    %66 = vmatpush.msra.mxu0 0.0
    %67 = vmatpush.msra.mxu0 0.0
    %68 = vmatpush.msra.mxu0 0.0
    %69 = vmatpush.msra.mxu0 0.0
    %70 = vmatpush.msra.mxu0 0.0
    %71 = vmatpush.msra.mxu0 0.0
    %72 = vmatpush.msra.mxu0 0.0
    %73 = vmatpush.msra.mxu0 0.0
    %74 = vmatpush.msra.mxu0 0.0
    %75 = vmatpush.msra.mxu0 0.0
    %76 = vmatpush.msra.mxu0 %v52
    %77 = vmatpush.msra.mxu0 %v51
    %78 = vmatpush.msra.mxu0 %v50
    %79 = vmatpush.msra.mxu0 %v49
    %80 = vmatmul.f32.gmra.mxu0 %v59
    %v81 = vpop.f32.mrf.mxu0
    %v82 = vadd.f32 %v55, %v81
    %83 = vmatmul.f32.gmra.mxu0 %v62
    %v84 = vpop.f32.mrf.mxu0
    %v85 = vadd.f32 %v55, %v84
    %86 = vdwg.mxu0
    %87 = vst [vmem:[#allocation7] sm:$0xff] %v82
    %88 = vst [vmem:[#allocation7 + $0x8] sm:$0xff] %v85
    // Predicated region
    $region22: #{tpu_custom_call.1} parent=1 // pred_check
      _
    $region23: #{tpu_custom_call.1} parent=1 // pred_check_branch
      %90 = sbr.rel (0) target = $region25
    $region24: #{tpu_custom_call.1} parent=1 // pred_region
      %92 = vsyncadd [#allocation4], 0
      %s93 = sshll.u32 [#allocation7], 4
      %s94 = int_to_ptr.vmem [resolvable:$true] %s93
      %s95 = sshll.u32 %s3, 4
      %s96 = int_to_ptr.hbm [resolvable:$true] %s95
      %101 = dma.vmem_to_hbm [thread:$0]  %s94, 256, %s96, [#allocation4], 128, 128, 8
    $region25: #{tpu_custom_call.1} parent=1 // pred_fallthru
      _
    // Predicated region
    $region26: #{tpu_custom_call.1} parent=1 // pred_check
      _
    $region27: #{tpu_custom_call.1} parent=1 // pred_check_branch
      %103 = sbr.rel (0) target = $region29
    $region28: #{tpu_custom_call.1} parent=1 // pred_region
      %105 = dma.done [#allocation4], 256
    $region29: #{tpu_custom_call.1} parent=1 // pred_fallthru
      _
    %106 = vsyncpa [#allocation3], 1
    %107 = vsyncpa [#allocation6], 1
    %108 = vsyncpa [#allocation4], 1

</llo_original>
